<compile_context>
chip_gen: v7x
topology: tpu7x:2x2x1
jax: 0.10.0
libtpu: 0.0.40
codegen_flags: <defaults>
</compile_context>

<pallas_src>
import math
from typing import NamedTuple, Optional

import jax
import jax.numpy as jnp
from jax.experimental import pallas as pl
from jax.experimental.pallas import tpu as pltpu


def _round_up(x: int, m: int) -> int:
    return (x + m - 1) // m * m


class SwishGLUParams(NamedTuple):
    w_fused: jax.Array   # (k_pad, 2 * n_pad); column block n = [Wp_n | Wg_n]
    b_fused: jax.Array   # (1, 2 * n_pad); same fused per-tile layout, f32
    in_dim: int
    out_dim: int
    tn: int              # N tile (multiple of 128)
    tk: int              # K tile
    k_pad: int
    n_pad: int


def prepare_swishglu_params(weight, bias, out_dim, *, tn=512, tk=512,
                            dtype: Optional[jnp.dtype] = None):
    """Pack PyTorch nn.Linear(in_dim, 2*out_dim) params for the kernel.

    Call this ONCE per set of weights (outside the per-call hot path): it
    transposes, zero-pads to tile multiples, and interleaves the projected /
    gate halves per N tile so the kernel runs a single fused matmul.
    `dtype=jnp.bfloat16` casts the MXU inputs (accumulation stays f32).
    """
    two_out, in_dim = weight.shape
    assert two_out == 2 * out_dim, "weight must be (2*out_dim, in_dim)"

    tn_eff = min(_round_up(tn, 128), _round_up(out_dim, 128))
    n_pad = _round_up(out_dim, tn_eff)
    if in_dim <= tk:
        tk_eff = in_dim                       # single K step, no K padding
    else:
        tk_eff = _round_up(tk, 128)
    k_pad = _round_up(in_dim, tk_eff)

    # tensor_split(2, dim=-1) of the Linear output == first/second weight rows.
    wp = weight[:out_dim, :].T                # (in_dim, out_dim)
    wg = weight[out_dim:, :].T
    bp = bias[:out_dim]
    bg = bias[out_dim:]

    wp = jnp.pad(wp, ((0, k_pad - in_dim), (0, n_pad - out_dim)))
    wg = jnp.pad(wg, ((0, k_pad - in_dim), (0, n_pad - out_dim)))
    bp = jnp.pad(bp, (0, n_pad - out_dim))
    bg = jnp.pad(bg, (0, n_pad - out_dim))

    nb = n_pad // tn_eff
    w_fused = jnp.concatenate(
        [wp.reshape(k_pad, nb, tn_eff), wg.reshape(k_pad, nb, tn_eff)], axis=2
    ).reshape(k_pad, 2 * n_pad)
    b_fused = jnp.concatenate(
        [bp.reshape(nb, tn_eff), bg.reshape(nb, tn_eff)], axis=1
    ).reshape(1, 2 * n_pad).astype(jnp.float32)

    if dtype is not None:
        w_fused = w_fused.astype(dtype)

    return SwishGLUParams(w_fused, b_fused, in_dim, out_dim,
                          tn_eff, tk_eff, k_pad, n_pad)


def _swishglu_kernel(x_ref, w_ref, b_ref, o_ref, acc_ref):
    k = pl.program_id(2)

    @pl.when(k == 0)
    def _():
        acc_ref[...] = jnp.zeros_like(acc_ref)

    # Single fused MXU matmul per step: columns [0:tn] -> projected, [tn:] -> gate.
    acc_ref[...] += jnp.dot(x_ref[...], w_ref[...],
                            preferred_element_type=jnp.float32)

    @pl.when(k == pl.num_programs(2) - 1)
    def _():
        tn = o_ref.shape[-1]
        r = acc_ref[...] + b_ref[...]          # f32 epilogue
        p = r[:, :tn]                           # projected half
        g = r[:, tn:]                           # gate half
        o_ref[...] = (p * (g * jax.nn.sigmoid(g))).astype(o_ref.dtype)


def swishglu(x, params: SwishGLUParams, *, tm=256):
    """SwishGLU forward: (..., in_dim) -> (..., out_dim)."""
    in_dim = x.shape[-1]
    assert in_dim == params.in_dim
    lead = x.shape[:-1]
    M = math.prod(lead) if lead else 1
    out_dtype = x.dtype

    tm = max(8, _round_up(tm, 8))
    tm_eff = min(tm, _round_up(M, 8))
    m_pad = _round_up(M, tm_eff)

    x2d = x.reshape(M, in_dim)
    if (m_pad, params.k_pad) != (M, in_dim):
        x2d = jnp.pad(x2d, ((0, m_pad - M), (0, params.k_pad - in_dim)))
    x2d = x2d.astype(params.w_fused.dtype)

    num_n = params.n_pad // params.tn
    num_m = m_pad // tm_eff
    num_k = params.k_pad // params.tk

    out2d = pl.pallas_call(
        _swishglu_kernel,
        out_shape=jax.ShapeDtypeStruct((m_pad, params.n_pad), out_dtype),
        grid_spec=pltpu.PrefetchScalarGridSpec(
            num_scalar_prefetch=0,
            grid=(num_n, num_m, num_k),           # N outer, M middle, K inner
            in_specs=[
                pl.BlockSpec((tm_eff, params.tk),
                             lambda n, m, k: (m, k)),              # x tile
                pl.BlockSpec((params.tk, 2 * params.tn),
                             lambda n, m, k: (k, n)),              # fused W tile
                pl.BlockSpec((1, 2 * params.tn),
                             lambda n, m, k: (0, n)),              # fused bias
            ],
            out_specs=pl.BlockSpec((tm_eff, params.tn),
                                   lambda n, m, k: (m, n)),
            scratch_shapes=[pltpu.VMEM((tm_eff, 2 * params.tn), jnp.float32)],
        ),
        compiler_params=pltpu.CompilerParams(
            dimension_semantics=("parallel", "parallel", "arbitrary")),
    )(x2d, params.w_fused, params.b_fused)

    return out2d[:M, :params.out_dim].reshape(*lead, params.out_dim)


def swishglu_ref(x, weight, bias, out_dim):
    y = jnp.einsum("...i,oi->...o", x, weight,
                   preferred_element_type=jnp.float32) + bias
    projected, gate = y[..., :out_dim], y[..., out_dim:]
    return (projected * (gate * jax.nn.sigmoid(gate))).astype(x.dtype)


if __name__ == "__main__":
    key = jax.random.PRNGKey(0)
    k_x, k_w, k_b, k_x2 = jax.random.split(key, 4)

    # Test 1: the module's natural small shape.
    batch, seq, in_dim, out_dim = 2, 8, 32, 32
    x = jax.random.normal(k_x, (batch, seq, in_dim), dtype=jnp.float32)
    weight = jax.random.normal(k_w, (2 * out_dim, in_dim), dtype=jnp.float32) * 0.1
    bias = jax.random.normal(k_b, (2 * out_dim,), dtype=jnp.float32) * 0.1

    params = prepare_swishglu_params(weight, bias, out_dim)   # pack once
    out = jax.block_until_ready(swishglu(x, params))
    ref = swishglu_ref(x, weight, bias, out_dim)
    assert out.shape == (batch, seq, out_dim)
    assert jnp.allclose(out, ref, atol=1e-4, rtol=1e-4), "mismatch vs reference (test 1)"

    # Test 2: ragged M and non-128 out_dim exercise the padding paths.
    b2, s2, in2, od2 = 3, 5, 48, 40
    x2 = jax.random.normal(k_x2, (b2, s2, in2), dtype=jnp.float32)
    w2 = jax.random.normal(k_w, (2 * od2, in2), dtype=jnp.float32) * 0.1
    bb2 = jax.random.normal(k_b, (2 * od2,), dtype=jnp.float32) * 0.1
    params2 = prepare_swishglu_params(w2, bb2, od2)
    out2 = jax.block_until_ready(swishglu(x2, params2))
    ref2 = swishglu_ref(x2, w2, bb2, od2)
    assert out2.shape == (b2, s2, od2)
    assert jnp.allclose(out2, ref2, atol=1e-4, rtol=1e-4), "mismatch vs reference (test 2)"

    print("KERNEL_OK")
</pallas_src>

<mosaic_0001>
module attributes {stable_mosaic.version = 11 : i64} {
  func.func @_swishglu_kernel(%arg0: i32, %arg1: i32, %arg2: i32, %arg3: memref<16x32xf32, #tpu.memory_space<vmem>>, %arg4: memref<32x256xf32, #tpu.memory_space<vmem>>, %arg5: memref<1x256xf32, #tpu.memory_space<vmem>>, %arg6: memref<16x128xf32, #tpu.memory_space<vmem>>, %arg7: memref<16x256xf32, #tpu.memory_space<vmem>>) attributes {dimension_semantics = [#tpu.dimension_semantics<parallel>, #tpu.dimension_semantics<parallel>, #tpu.dimension_semantics<arbitrary>], iteration_bounds = array<i64: 1, 1, 1>, scalar_prefetch = 0 : i64, scratch_operands = 1 : i64, tpu.core_type = #tpu.core_type<tc>, window_params = [{transform_indices = @transform_0, window_bounds = array<i64: 16, 32>}, {transform_indices = @transform_1, window_bounds = array<i64: 32, 256>}, {transform_indices = @transform_2, window_bounds = array<i64: 1, 256>}, {transform_indices = @transform_3, window_bounds = array<i64: 16, 128>}]} {
    %c0_i32 = arith.constant 0 : i32
    %0 = arith.cmpi eq, %arg2, %c0_i32 : i32
    %1 = arith.extui %0 : i1 to i32
    %c0_i32_0 = arith.constant 0 : i32
    %2 = arith.cmpi ne, %1, %c0_i32_0 : i32
    scf.if %2 {
      %cst_10 = arith.constant 0.000000e+00 : f32
      %12 = vector.broadcast %cst_10 : f32 to vector<16x256xf32>
      %c0_11 = arith.constant 0 : index
      %c0_12 = arith.constant 0 : index
      %13 = vector.load %arg7[%c0_11, %c0_12] : memref<16x256xf32, #tpu.memory_space<vmem>>, vector<16x256xf32>
      tpu.vector_store %arg7[%c0_11, %c0_12], %12 {strides = array<i32>} : memref<16x256xf32, #tpu.memory_space<vmem>>, vector<16x256xf32>,
    } else {
    }
    %c0 = arith.constant 0 : index
    %c0_1 = arith.constant 0 : index
    %3 = vector.load %arg7[%c0, %c0_1] : memref<16x256xf32, #tpu.memory_space<vmem>>, vector<16x256xf32>
    %c0_2 = arith.constant 0 : index
    %c0_3 = arith.constant 0 : index
    %4 = vector.load %arg3[%c0_2, %c0_3] : memref<16x32xf32, #tpu.memory_space<vmem>>, vector<16x32xf32>
    %c0_4 = arith.constant 0 : index
    %c0_5 = arith.constant 0 : index
    %5 = vector.load %arg4[%c0_4, %c0_5] : memref<32x256xf32, #tpu.memory_space<vmem>>, vector<32x256xf32>
    %cst = arith.constant dense<0.000000e+00> : vector<16x256xf32>
    %6 = tpu.matmul %4, %5, %cst {dimension_numbers = #tpu.dot_dimension_numbers<[1], [0], [0], [1], [0, 0, 1, 1], [], []>} : vector<16x32xf32>, vector<32x256xf32>, vector<16x256xf32> -> vector<16x256xf32>
    %7 = arith.addf %3, %6 : vector<16x256xf32>
    %c0_6 = arith.constant 0 : index
    %c0_7 = arith.constant 0 : index
    %8 = vector.load %arg7[%c0_6, %c0_7] : memref<16x256xf32, #tpu.memory_space<vmem>>, vector<16x256xf32>
    tpu.vector_store %arg7[%c0_6, %c0_7], %7 {strides = array<i32>} : memref<16x256xf32, #tpu.memory_space<vmem>>, vector<16x256xf32>,
    %c0_i32_8 = arith.constant 0 : i32
    %9 = arith.cmpi eq, %arg2, %c0_i32_8 : i32
    %10 = arith.extui %9 : i1 to i32
    %c0_i32_9 = arith.constant 0 : i32
    %11 = arith.cmpi ne, %10, %c0_i32_9 : i32
    scf.if %11 {
      %c0_10 = arith.constant 0 : index
      %c0_11 = arith.constant 0 : index
      %12 = vector.load %arg7[%c0_10, %c0_11] : memref<16x256xf32, #tpu.memory_space<vmem>>, vector<16x256xf32>
      %c0_12 = arith.constant 0 : index
      %c0_13 = arith.constant 0 : index
      %13 = vector.load %arg5[%c0_12, %c0_13] : memref<1x256xf32, #tpu.memory_space<vmem>>, vector<1x256xf32>
      %14 = vector.broadcast %13 : vector<1x256xf32> to vector<16x256xf32>
      %15 = arith.addf %12, %14 : vector<16x256xf32>
      %16 = vector.extract_strided_slice %15 {offsets = [0, 0], sizes = [16, 128], strides = [1, 1]} : vector<16x256xf32> to vector<16x128xf32>
      %17 = vector.extract_strided_slice %15 {offsets = [0, 128], sizes = [16, 128], strides = [1, 1]} : vector<16x256xf32> to vector<16x128xf32>
      %18 = arith.negf %17 : vector<16x128xf32>
      %19 = math.exp %18 : vector<16x128xf32>
      %cst_14 = arith.constant 1.000000e+00 : f32
      %20 = vector.broadcast %cst_14 : f32 to vector<16x128xf32>
      %21 = arith.addf %20, %19 : vector<16x128xf32>
      %22 = arith.divf %20, %21 : vector<16x128xf32>
      %23 = arith.mulf %17, %22 : vector<16x128xf32>
      %24 = arith.mulf %16, %23 : vector<16x128xf32>
      %c0_15 = arith.constant 0 : index
      %c0_16 = arith.constant 0 : index
      %25 = vector.load %arg6[%c0_15, %c0_16] : memref<16x128xf32, #tpu.memory_space<vmem>>, vector<16x128xf32>
      tpu.vector_store %arg6[%c0_15, %c0_16], %24 {strides = array<i32>} : memref<16x128xf32, #tpu.memory_space<vmem>>, vector<16x128xf32>,
    } else {
    }
    return
  }
  func.func @transform_0(%arg0: i32, %arg1: i32, %arg2: i32) -> (i32, i32) {
    %c0_i32 = arith.constant 0 : i32
    return %arg1, %arg2 : i32, i32
  }
  func.func @transform_1(%arg0: i32, %arg1: i32, %arg2: i32) -> (i32, i32) {
    %c0_i32 = arith.constant 0 : i32
    return %arg2, %arg0 : i32, i32
  }
  func.func @transform_2(%arg0: i32, %arg1: i32, %arg2: i32) -> (i32, i32) {
    %c0_i32 = arith.constant 0 : i32
    %c0_i32_0 = arith.constant 0 : i32
    return %c0_i32, %arg0 : i32, i32
  }
  func.func @transform_3(%arg0: i32, %arg1: i32, %arg2: i32) -> (i32, i32) {
    %c0_i32 = arith.constant 0 : i32
    return %arg1, %arg0 : i32, i32
  }
}

</mosaic_0001>

<llo_original>
// kernel: tpu_custom_call.1
$region0: #{tpu_custom_call.1}
  #allocation0 [shape = 'u32[]', space=smem, size = 0x4, offset = 0x4, fixed_abs, tag = 'smem constant byte address 0x4 - core index']
  #allocation1 [shape = 'u32[144,128]{1,0:T(1,128)}', space=vmem, size = 0x12000, scoped, tag = 'internal scratch']
  #allocation2 [shape = 'f32[16,256]{1,0:T(8,128)}', space=vmem, size = 0x4000, scoped, tag = 'scratch operand']
  %s0 = inlined_call_operand.hbm [shape: f32[16,32], index: 0, kind: input, shape index: {}]
  %s1 = inlined_call_operand.hbm [shape: f32[32,256], index: 1, kind: input, shape index: {}]
  %s2 = inlined_call_operand.vmem [shape: f32[1,256], index: 2, kind: input, shape index: {}]
  %s3 = inlined_call_operand.hbm [shape: f32[16,128], index: 3, kind: output, shape index: {}]
  %s4 = sld [smem:[#allocation0]]
  $region38: #{tpu_custom_call.1} parent=0
    _
  %s6 = ssub.s32 1, %s4
  %s7 = scalar_select 0, %s6, %s4
  $region1: #{tpu_custom_call.1} parent=0
    #allocation3 [shape = 'u8[8192]{0}', space=vmem, size = 0x2000, scoped, tag = 'input window, operand 0, single buffered']
    #allocation4 [shape = 's32[1]{0}', space=sflag, size = 0x4, scoped, tag = 'scoped memory for tpu_custom_call.1']
    #allocation5 [shape = 's32[1]{0}', space=sflag, size = 0x4, scoped, tag = 'scoped memory for tpu_custom_call.1']
    #allocation6 [shape = 'u8[32768]{0}', space=vmem, size = 0x8000, scoped, tag = 'input window, operand 1, single buffered']
    #allocation7 [shape = 's32[1]{0}', space=sflag, size = 0x4, scoped, tag = 'scoped memory for tpu_custom_call.1']
    #allocation8 [shape = 'u8[8192]{0}', space=vmem, size = 0x2000, scoped, tag = 'output window, operand 0, single buffered']
    %8 = vsyncpa [#allocation4], 0
    %9 = vsyncpa [#allocation7], 0
    %10 = vsyncpa [#allocation5], 0
    // Predicated region
    $region2: #{tpu_custom_call.1} parent=1 // pred_check
      _
    $region3: #{tpu_custom_call.1} parent=1 // pred_check_branch
      %12 = sbr.rel (0) target = $region5
    $region4: #{tpu_custom_call.1} parent=1 // pred_region
      %s14 = ssub.s32 256, 256
      %15 = vsyncadd [#allocation4], %s14
      %s16 = sshll.u32 [#allocation3], 4
      %s17 = int_to_ptr.vmem [resolvable:$true] %s16
      %22 = dma.hbm_to_vmem [thread:$0]  %s0, 256, %s17, [#allocation4], 128, 128, 8
    $region5: #{tpu_custom_call.1} parent=1 // pred_fallthru
      _
    // Predicated region
    $region6: #{tpu_custom_call.1} parent=1 // pred_check
      _
    $region7: #{tpu_custom_call.1} parent=1 // pred_check_branch
      %24 = sbr.rel (0) target = $region9
    $region8: #{tpu_custom_call.1} parent=1 // pred_region
      %s26 = ssub.s32 1024, 1024
      %27 = vsyncadd [#allocation7], %s26
      %s28 = sshll.u32 [#allocation6], 4
      %s29 = int_to_ptr.vmem [resolvable:$true] %s28
      %34 = dma.hbm_to_vmem [thread:$0]  %s1, 1024, %s29, [#allocation7], 256, 256, 16
    $region9: #{tpu_custom_call.1} parent=1 // pred_fallthru
      _
    // Predicated region
    $region10: #{tpu_custom_call.1} parent=1 // pred_check
      _
    $region11: #{tpu_custom_call.1} parent=1 // pred_check_branch
      %36 = sbr.rel (0) target = $region13
    $region12: #{tpu_custom_call.1} parent=1 // pred_region
      _
    $region13: #{tpu_custom_call.1} parent=1 // pred_fallthru
      _
    // Predicated region
    $region14: #{tpu_custom_call.1} parent=1 // pred_check
      _
    $region15: #{tpu_custom_call.1} parent=1 // pred_check_branch
      %38 = sbr.rel (0) target = $region17
    $region16: #{tpu_custom_call.1} parent=1 // pred_region
      %39 = dma.done [#allocation4], 256
    $region17: #{tpu_custom_call.1} parent=1 // pred_fallthru
      _
    // Predicated region
    $region18: #{tpu_custom_call.1} parent=1 // pred_check
      _
    $region19: #{tpu_custom_call.1} parent=1 // pred_check_branch
      %41 = sbr.rel (0) target = $region21
    $region20: #{tpu_custom_call.1} parent=1 // pred_region
      %42 = dma.done [#allocation7], 1024
    $region21: #{tpu_custom_call.1} parent=1 // pred_fallthru
      _
    %p43 = scmp.eq.s32.totalorder 0, 0
    // Predicated region
    $region22: #{tpu_custom_call.1} parent=1 // pred_check
      %p44 = pneg %p43
    $region23: #{tpu_custom_call.1} parent=1 // pred_check_branch
      %46 = sbr.rel (%p44) target = $region25
    $region24: #{tpu_custom_call.1} parent=1 // pred_region
      %47 = vst [vmem:[#allocation2] sm:$0xff] 0.0
      %48 = vst [vmem:[#allocation2 + $0x8] sm:$0xff] 0.0
      %49 = vst [vmem:[#allocation2 + $0x10] sm:$0xff] 0.0
      %50 = vst [vmem:[#allocation2 + $0x18] sm:$0xff] 0.0
    $region25: #{tpu_custom_call.1} parent=1 // pred_fallthru
      _
    %v51 = vld [vmem:[#allocation2] sm:$0xff]
    %v52 = vld [vmem:[#allocation2 + $0x8] sm:$0xff]
    %v53 = vld [vmem:[#allocation2 + $0x10] sm:$0xff]
    %v54 = vld [vmem:[#allocation2 + $0x18] sm:$0xff]
    %v55 = vld [vmem:[#allocation3] sm:$0xff]
    %v56 = vld [vmem:[#allocation3 + $0x8] sm:$0xff]
    %v57 = vld [vmem:[#allocation6] sm:$0xff]
    %v58 = vld [vmem:[#allocation6 + $0x8] sm:$0xff]
    %v59 = vld [vmem:[#allocation6 + $0x10] sm:$0xff]
    %v60 = vld [vmem:[#allocation6 + $0x18] sm:$0xff]
    %v61 = vld [vmem:[#allocation6 + $0x20] sm:$0xff]
    %v62 = vld [vmem:[#allocation6 + $0x28] sm:$0xff]
    %v63 = vld [vmem:[#allocation6 + $0x30] sm:$0xff]
    %v64 = vld [vmem:[#allocation6 + $0x38] sm:$0xff]
    %vm65 = vcmask 261120
    %v67 = vsel %vm65, %v55, 0
    %v70 = vsel %vm65, %v56, 0
    %72 = vmatprep.subr.mxu0 %v58
    %73 = vmatpush1.msra.mxu0 %v57
    %74 = vmatprep.subr.mxu0 %v60
    %75 = vmatpush1.msra.mxu0 %v59
    %76 = vmatprep.subr.mxu0 %v62
    %77 = vmatpush1.msra.mxu0 %v61
    %78 = vmatprep.subr.mxu0 %v64
    %79 = vmatpush1.msra.mxu0 %v63
    %80 = vmatprep.subr.mxu0 0.0
    %81 = vmatpush1.msra.mxu0 0.0
    %82 = vmatprep.subr.mxu0 0.0
    %83 = vmatpush1.msra.mxu0 0.0
    %84 = vmatprep.subr.mxu0 0.0
    %85 = vmatpush1.msra.mxu0 0.0
    %86 = vmatprep.subr.mxu0 0.0
    %87 = vmatpush1.msra.mxu0 0.0
    %88 = vmatprep.subr.mxu0 0.0
    %89 = vmatpush1.msra.mxu0 0.0
    %90 = vmatprep.subr.mxu0 0.0
    %91 = vmatpush1.msra.mxu0 0.0
    %92 = vmatprep.subr.mxu0 0.0
    %93 = vmatpush1.msra.mxu0 0.0
    %94 = vmatprep.subr.mxu0 0.0
    %95 = vmatpush1.msra.mxu0 0.0
    %96 = vmatprep.subr.mxu0 0.0
    %97 = vmatpush1.msra.mxu0 0.0
    %98 = vmatprep.subr.mxu0 0.0
    %99 = vmatpush1.msra.mxu0 0.0
    %100 = vmatprep.subr.mxu0 0.0
    %101 = vmatpush1.msra.mxu0 0.0
    %102 = vmatprep.subr.mxu0 0.0
    %103 = vmatpush1.msra.mxu0 0.0
    %104 = vmatprep.subr.mxu0 0.0
    %105 = vmatpush1.msra.mxu0 0.0
    %106 = vmatprep.subr.mxu0 0.0
    %107 = vmatpush1.msra.mxu0 0.0
    %108 = vmatprep.subr.mxu0 0.0
    %109 = vmatpush1.msra.mxu0 0.0
    %110 = vmatprep.subr.mxu0 0.0
    %111 = vmatpush1.msra.mxu0 0.0
    %112 = vmatprep.subr.mxu0 0.0
    %113 = vmatpush1.msra.mxu0 0.0
    %114 = vmatprep.subr.mxu0 0.0
    %115 = vmatpush1.msra.mxu0 0.0
    %116 = vmatprep.subr.mxu0 0.0
    %117 = vmatpush1.msra.mxu0 0.0
    %118 = vmatprep.subr.mxu0 0.0
    %119 = vmatpush1.msra.mxu0 0.0
    %120 = vmatprep.subr.mxu0 0.0
    %121 = vmatpush1.msra.mxu0 0.0
    %122 = vmatprep.subr.mxu0 0.0
    %123 = vmatpush1.msra.mxu0 0.0
    %124 = vmatprep.subr.mxu0 0.0
    %125 = vmatpush1.msra.mxu0 0.0
    %126 = vmatprep.subr.mxu0 0.0
    %127 = vmatpush1.msra.mxu0 0.0
    %128 = vmatprep.subr.mxu0 0.0
    %129 = vmatpush1.msra.mxu0 0.0
    %130 = vmatprep.subr.mxu0 0.0
    %131 = vmatpush1.msra.mxu0 0.0
    %132 = vmatprep.subr.mxu0 0.0
    %133 = vmatpush1.msra.mxu0 0.0
    %134 = vmatprep.subr.mxu0 0.0
    %135 = vmatpush1.msra.mxu0 0.0
    %136 = vmatprep.mubr.f32.mxu0 0.0
    %137 = vmatmul.mubr.f32.gmra.mrb[0].mxu0 %v67
    %v138 = vpop.f32.mrb[0].mxu0
    %v139 = vadd.f32 0.0, %v138
    %v140 = vpop.f32.mrb[0].mxu0
    %v141 = vadd.f32 0.0, %v140
    %142 = vmatprep.mubr.f32.mxu0 0.0
    %143 = vmatmul.mubr.f32.gmra.mrb[0].mxu0 %v70
    %v144 = vpop.f32.mrb[0].mxu0
    %v145 = vadd.f32 0.0, %v144
    %v146 = vpop.f32.mrb[0].mxu0
    %v147 = vadd.f32 0.0, %v146
    %148 = vdwg.mxu0
    %v149 = vadd.f32 %v51, %v139
    %v150 = vadd.f32 %v52, %v141
    %v151 = vadd.f32 %v53, %v145
    %v152 = vadd.f32 %v54, %v147
    %153 = vst [vmem:[#allocation2] sm:$0xff] %v149
    %154 = vst [vmem:[#allocation2 + $0x8] sm:$0xff] %v150
    %155 = vst [vmem:[#allocation2 + $0x10] sm:$0xff] %v151
    %156 = vst [vmem:[#allocation2 + $0x18] sm:$0xff] %v152
    // Predicated region
    $region26: #{tpu_custom_call.1} parent=1 // pred_check
      %p157 = pneg %p43
    $region27: #{tpu_custom_call.1} parent=1 // pred_check_branch
      %159 = sbr.rel (%p157) target = $region29
    $region28: #{tpu_custom_call.1} parent=1 // pred_region
      %v160 = vld [vmem:[#allocation2] sm:$0xff]
      %v161 = vld [vmem:[#allocation2 + $0x8] sm:$0xff]
      %v162 = vld [vmem:[#allocation2 + $0x10] sm:$0xff]
      %v163 = vld [vmem:[#allocation2 + $0x18] sm:$0xff]
      %v164 = vld [vmem:[%s2] sm:$0x3]
      %v166 = vlaneseq
      %v167 = vshrl.u32 %v166, 7
      %v168 = vsub.s32 0, %v167
      %v169 = vrot.slane %v164, %v168
      %v170 = vlaneseq
      %v171 = vshrl.u32 %v170, 7
      %v172 = vsub.s32 1, %v171
      %v173 = vrot.slane %v164, %v172
      %v176 = vadd.f32 %v160, %v169
      %v177 = vadd.f32 %v161, %v173
      %v178 = vadd.f32 %v162, %v169
      %v179 = vadd.f32 %v163, %v173
      %v180 = vxor.u32 %v177, 2147483648
      %v181 = vxor.u32 %v179, 2147483648
      %v182 = vmul.f32 %v180, 1.442695
      %v183 = vpow.pop %v182
      %v184 = vmul.f32 %v181, 1.442695
      %v185 = vpow.pop %v184
      %v186 = vadd.f32 %v183, 1.0
      %v187 = vadd.f32 %v185, 1.0
      %v188 = vrcp.pop %v186
      %v189 = vmul.f32 1.0, %v188
      %v190 = vrcp.pop %v187
      %v191 = vmul.f32 1.0, %v190
      %v192 = vmul.f32 %v177, %v189
      %v193 = vmul.f32 %v179, %v191
      %v194 = vmul.f32 %v176, %v192
      %v195 = vmul.f32 %v178, %v193
      %196 = vst [vmem:[#allocation8] sm:$0xff] %v194
      %197 = vst [vmem:[#allocation8 + $0x8] sm:$0xff] %v195
    $region29: #{tpu_custom_call.1} parent=1 // pred_fallthru
      _
    // Predicated region
    $region30: #{tpu_custom_call.1} parent=1 // pred_check
      _
    $region31: #{tpu_custom_call.1} parent=1 // pred_check_branch
      %199 = sbr.rel (0) target = $region33
    $region32: #{tpu_custom_call.1} parent=1 // pred_region
      %s201 = ssub.s32 256, 256
      %202 = vsyncadd [#allocation5], %s201
      %s203 = sshll.u32 [#allocation8], 4
      %s204 = int_to_ptr.vmem [resolvable:$true] %s203
      %209 = dma.vmem_to_hbm [thread:$0]  %s204, 256, %s3, [#allocation5], 128, 128, 8
    $region33: #{tpu_custom_call.1} parent=1 // pred_fallthru
      _
    // Predicated region
    $region34: #{tpu_custom_call.1} parent=1 // pred_check
      _
    $region35: #{tpu_custom_call.1} parent=1 // pred_check_branch
      %211 = sbr.rel (0) target = $region37
    $region36: #{tpu_custom_call.1} parent=1 // pred_region
      %212 = dma.done [#allocation5], 256
    $region37: #{tpu_custom_call.1} parent=1 // pred_fallthru
      _
    %213 = vsyncpa [#allocation4], 1
    %214 = vsyncpa [#allocation7], 1
    %215 = vsyncpa [#allocation5], 1

</llo_original>
